<compile_context>
chip_gen: v6e
topology: v6e:2x2x1
jax: 0.10.0
libtpu: 0.0.40
codegen_flags: <defaults>
</compile_context>

<pallas_src>
import functools
import math

import jax
import jax.numpy as jnp
from jax.experimental import pallas as pl
from jax.experimental.pallas import tpu as pltpu


def _basic_attn_kernel(q_ref, kt_ref, vsum_ref, *rest,
                       scale, has_mask, return_attn):
    """One grid step: G heads x TQ query rows against all Lk keys.

    Blocks: q (G, TQ, D), kt (G, D, Lk), vsum (G, 1, D) f32,
            mask (TQ, Lk) or (G, TQ, Lk) int8 [optional],
            ctx (G, TQ, D), attn (G, TQ, Lk) f32 [optional].
    """
    idx = 0
    m_ref = None
    if has_mask:
        m_ref = rest[idx]
        idx += 1
    ctx_ref = rest[idx]
    idx += 1
    attn_ref = rest[idx] if return_attn else None

    q = q_ref[...]                       # (G, TQ, D)  native dtype
    kt = kt_ref[...]                     # (G, D, Lk)  native dtype

    # scores = Q @ K^T: contract D directly against the pre-transposed K
    # (lane-dense, MXU-natural rhs); accumulate in f32.
    scores = jax.lax.dot_general(
        q, kt,
        dimension_numbers=(((2,), (1,)), ((0,), (0,))),
        preferred_element_type=jnp.float32,
    )                                    # (G, TQ, Lk) f32

    # Scale in f32 (same order as the reference: divide, then mask).
    scores = scores * jnp.float32(scale)

    if has_mask:
        m = m_ref[...]
        if m.ndim == 2:                  # shared mask: broadcast over heads
            m = m[None, :, :]
        scores = jnp.where(m != 0, jnp.float32(-1000000000.0), scores)

    # Numerically stable softmax over the key axis (matches torch.softmax).
    m_row = jnp.max(scores, axis=-1, keepdims=True)
    p = jnp.exp(scores - m_row)
    denom = jnp.sum(p, axis=-1, keepdims=True)
    # Approx reciprocal uses the otherwise-idle EUP slot; one Newton step
    # restores full f32 accuracy so `attn` matches an exact softmax.
    r = pl.reciprocal(denom, approx=True)
    r = r * (jnp.float32(2.0) - denom * r)

    if return_attn:
        attn_ref[...] = (p * r).astype(attn_ref.dtype)

    # Literal semantics of torch.einsum('bhqk,bhvd->bhqd', attn, V):
    #   context = rowsum_k(attn) * colsum_v(V)   (outer product, no matmul).
    # rowsum_k(attn) = (sum_k p) * r = denom * r  -- reuses the softmax sums
    # instead of a third cross-lane reduction.
    rowsum = denom * r                                    # (G, TQ, 1) f32, ~1
    ctx_ref[...] = (rowsum * vsum_ref[...]).astype(ctx_ref.dtype)


def _vmem_capacity_bytes():
    """Physical VMEM of the current chip; conservative fallback if unknown."""
    try:
        cap = getattr(pltpu.get_tpu_info(), "vmem_capacity_bytes", None)
        if cap:
            return int(cap)
    except Exception:
        pass
    return 64 * 1024 * 1024              # v7x per-TC (smallest current part)


def _estimate_vmem_bytes(tq, lk, d, g, in_bytes, out_bytes,
                         has_mask, mask_per_head, return_attn):
    """Rough VMEM residency of one grid step: 2x-buffered blocks + live f32."""
    lane = lambda n: -(-n // 128) * 128   # pad last dim to 128 lanes
    sub = lambda n: -(-n // 8) * 8        # pad 2nd-last dim to 8 sublanes
    total = 0
    total += 2 * g * sub(tq) * lane(d) * in_bytes          # Q blocks
    total += 2 * g * sub(d) * lane(lk) * in_bytes          # K^T blocks
    total += 2 * g * 8 * lane(d) * 4                       # V colsum (f32)
    total += 2 * g * sub(tq) * lane(d) * out_bytes         # ctx out blocks
    if has_mask:
        total += 2 * (g if mask_per_head else 1) * sub(tq) * lane(lk)  # int8
    if return_attn:
        total += 2 * g * sub(tq) * lane(lk) * 4            # attn out blocks
    total += 3 * g * sub(tq) * lane(lk) * 4                # live scores/p/attn
    return total


def _choose_query_tile(lq, lk, d, g, in_bytes, out_bytes,
                       has_mask, mask_per_head, return_attn, budget):
    """Largest TQ dividing Lq whose estimated VMEM residency fits the budget."""
    cands = [lq] + [t for t in (2048, 1024, 512, 256, 128, 64, 32, 16, 8)
                    if t < lq and lq % t == 0]
    for tq in cands:
        if _estimate_vmem_bytes(tq, lk, d, g, in_bytes, out_bytes,
                                has_mask, mask_per_head, return_attn) <= budget:
            return tq
    return cands[-1]                      # best effort: smallest candidate


def basic_attn(Q, K, V, attn_mask, d_k, *, return_attn=True):
    """Pallas equivalent of BasicAttn.forward.

    Returns (context, attn) if return_attn, else context only (fast path that
    skips the dominant f32 attn HBM write).
    """
    B, H, Lq, D = Q.shape
    Lk = K.shape[2]
    BH = B * H

    q = Q.reshape(BH, Lq, D)
    # K transposed once in the wrapper: lane-dense (BH, D, Lk) kernel blocks.
    kt = jnp.swapaxes(K.reshape(BH, Lk, D), 1, 2)
    # Only colsum_v(V) is ever needed (see kernel docstring): (BH, 1, D) f32.
    vsum = jnp.sum(V.reshape(BH, Lk, D).astype(jnp.float32),
                   axis=1, keepdims=True)

    has_mask = attn_mask is not None
    mask_per_head = False
    mask = None
    if has_mask:
        m = jnp.asarray(attn_mask, dtype=jnp.bool_)
        lead = m.shape[:-2] if m.ndim >= 2 else ()
        if m.ndim < 2 or all(s == 1 for s in lead):
            # Head/batch-invariant mask: keep it 2-D and share one (TQ, Lk)
            # block across the head-group grid axis (no BH x broadcast).
            m2 = m if m.ndim < 2 else m.reshape(m.shape[-2:])
            mask = jnp.broadcast_to(m2, (Lq, Lk)).astype(jnp.int8)
        else:
            # Genuinely per-(batch, head) mask: fall back to full shape.
            mask_per_head = True
            mask = (jnp.broadcast_to(m, (B, H, Lq, Lk))
                    .reshape(BH, Lq, Lk).astype(jnp.int8))

    # Pack G heads per grid step: amortizes lane/MXU width (when D < 128) and
    # the ~0.35 us per-grid-step overhead.
    G = max(1, min(8, 128 // max(D, 1)))
    while G > 1 and BH % G != 0:
        G -= 1

    in_bytes = jnp.dtype(Q.dtype).itemsize
    out_bytes = in_bytes

    vmem_cap = _vmem_capacity_bytes()
    vmem_limit = int(vmem_cap * 0.85)          # leave compiler scratch headroom
    budget = int(vmem_limit * 0.75)

    TQ = _choose_query_tile(Lq, Lk, D, G, in_bytes, out_bytes,
                            has_mask, mask_per_head, return_attn, budget)
    grid = (BH // G, Lq // TQ)

    in_specs = [
        pl.BlockSpec((G, TQ, D), lambda h, qi: (h, qi, 0)),   # Q tile
        pl.BlockSpec((G, D, Lk), lambda h, qi: (h, 0, 0)),    # K^T (head group)
        pl.BlockSpec((G, 1, D), lambda h, qi: (h, 0, 0)),     # V column sums
    ]
    inputs = [q, kt, vsum]
    if has_mask:
        if mask_per_head:
            in_specs.append(pl.BlockSpec((G, TQ, Lk), lambda h, qi: (h, qi, 0)))
        else:
            in_specs.append(pl.BlockSpec((TQ, Lk), lambda h, qi: (qi, 0)))
        inputs.append(mask)

    ctx_spec = pl.BlockSpec((G, TQ, D), lambda h, qi: (h, qi, 0))
    ctx_shape = jax.ShapeDtypeStruct((BH, Lq, D), Q.dtype)
    if return_attn:
        out_specs = [ctx_spec,
                     pl.BlockSpec((G, TQ, Lk), lambda h, qi: (h, qi, 0))]
        out_shape = (ctx_shape, jax.ShapeDtypeStruct((BH, Lq, Lk), jnp.float32))
    else:
        out_specs = ctx_spec
        out_shape = ctx_shape

    mask_bytes = (BH if mask_per_head else 1) * Lq * Lk if has_mask else 0
    cost = pl.CostEstimate(
        flops=2 * BH * Lq * Lk * D,
        transcendentals=BH * Lq * Lk,
        bytes_accessed=int(BH * Lq * D * in_bytes          # Q
                           + BH * D * Lk * in_bytes        # K^T
                           + BH * D * 4                    # V colsum
                           + mask_bytes                    # mask (int8)
                           + BH * Lq * D * out_bytes       # ctx
                           + (BH * Lq * Lk * 4 if return_attn else 0)),
    )

    kernel = functools.partial(
        _basic_attn_kernel,
        scale=1.0 / math.sqrt(d_k),
        has_mask=has_mask,
        return_attn=return_attn,
    )

    out = pl.pallas_call(
        kernel,
        out_shape=out_shape,
        grid_spec=pltpu.PrefetchScalarGridSpec(
            num_scalar_prefetch=0,
            grid=grid,
            in_specs=in_specs,
            out_specs=out_specs,
        ),
        compiler_params=pltpu.CompilerParams(
            # Head-group axis parallel (a 2-TC split keeps K resident per
            # core for its whole qi range); qi axis arbitrary.
            dimension_semantics=("parallel", "arbitrary"),
            vmem_limit_bytes=vmem_limit,
        ),
        cost_estimate=cost,
    )(*inputs)

    if return_attn:
        ctx, attn = out
        return ctx.reshape(B, H, Lq, D), attn.reshape(B, H, Lq, Lk)
    return out.reshape(B, H, Lq, D)


def _reference(Q, K, V, attn_mask, d_k):
    # Literal JAX transcription of the PyTorch module (including the
    # 'bhqk,bhvd->bhqd' einsum whose 'k'/'v' axes are independently summed).
    scores = jnp.einsum("bhqd,bhkd->bhqk", Q, K) / math.sqrt(d_k)
    if attn_mask is not None:
        scores = jnp.where(jnp.asarray(attn_mask, jnp.bool_),
                           jnp.float32(-1000000000.0), scores)
    attn = jax.nn.softmax(scores, axis=-1)
    context = jnp.einsum("bhqk,bhvd->bhqd", attn, V)
    return context, attn


if __name__ == "__main__":
    B, H, L, D = 2, 4, 8, 32  # batch, heads, seq, d_k
    key = jax.random.PRNGKey(0)
    kq, kk, kv = jax.random.split(key, 3)
    Q = jax.random.normal(kq, (B, H, L, D), dtype=jnp.float32)
    K = jax.random.normal(kk, (B, H, L, D), dtype=jnp.float32)
    V = jax.random.normal(kv, (B, H, L, D), dtype=jnp.float32)
    # Causal mask, True above the diagonal (masked); passed in its natural
    # 2-D shape (it broadcasts over (B, H) both here and in the torch module).
    attn_mask = jnp.triu(jnp.ones((L, L), dtype=jnp.bool_), k=1)

    ctx, attn = basic_attn(Q, K, V, attn_mask, d_k=D)
    jax.block_until_ready((ctx, attn))

    ctx_ref, attn_ref = _reference(Q, K, V, attn_mask, d_k=D)
    # ctx depends only on softmax row-sums (~1) and V column sums, so it is
    # insensitive to matmul precision; attn gets a slightly looser tolerance
    # to cover MXU multi-pass f32 vs the XLA reference matmul.
    assert jnp.allclose(ctx, ctx_ref, atol=1e-4, rtol=1e-4), "context mismatch"
    assert jnp.allclose(attn, attn_ref, atol=2e-3, rtol=2e-3), "attn mismatch"

    # Fast path: context only (skips the dominant f32 attn HBM write).
    ctx_only = basic_attn(Q, K, V, attn_mask, d_k=D, return_attn=False)
    jax.block_until_ready(ctx_only)
    assert jnp.allclose(ctx_only, ctx_ref, atol=1e-4, rtol=1e-4), "ctx-only mismatch"

    print("KERNEL_OK")
</pallas_src>

<mosaic_0001>
module attributes {stable_mosaic.version = 11 : i64} {
  func.func @_basic_attn_kernel(%arg0: i32, %arg1: i32, %arg2: memref<4x8x32xf32, #tpu.memory_space<vmem>>, %arg3: memref<4x32x8xf32, #tpu.memory_space<vmem>>, %arg4: memref<4x1x32xf32, #tpu.memory_space<vmem>>, %arg5: memref<8x8xi8, #tpu.memory_space<vmem>>, %arg6: memref<4x8x32xf32, #tpu.memory_space<vmem>>, %arg7: memref<4x8x8xf32, #tpu.memory_space<vmem>>) attributes {dimension_semantics = [#tpu.dimension_semantics<parallel>, #tpu.dimension_semantics<arbitrary>], iteration_bounds = array<i64: 2, 1>, scalar_prefetch = 0 : i64, scratch_operands = 0 : i64, tpu.core_type = #tpu.core_type<tc>, window_params = [{transform_indices = @transform_0, window_bounds = array<i64: 4, 8, 32>}, {transform_indices = @transform_1, window_bounds = array<i64: 4, 32, 8>}, {transform_indices = @transform_2, window_bounds = array<i64: 4, 1, 32>}, {transform_indices = @transform_3, window_bounds = array<i64: 8, 8>}, {transform_indices = @transform_4, window_bounds = array<i64: 4, 8, 32>}, {transform_indices = @transform_5, window_bounds = array<i64: 4, 8, 8>}]} {
    %c0 = arith.constant 0 : index
    %c0_0 = arith.constant 0 : index
    %c0_1 = arith.constant 0 : index
    %0 = vector.load %arg2[%c0, %c0_0, %c0_1] : memref<4x8x32xf32, #tpu.memory_space<vmem>>, vector<4x8x32xf32>
    %c0_2 = arith.constant 0 : index
    %c0_3 = arith.constant 0 : index
    %c0_4 = arith.constant 0 : index
    %1 = vector.load %arg3[%c0_2, %c0_3, %c0_4] : memref<4x32x8xf32, #tpu.memory_space<vmem>>, vector<4x32x8xf32>
    %cst = arith.constant dense<0.000000e+00> : vector<4x8x8xf32>
    %2 = tpu.matmul %0, %1, %cst {dimension_numbers = #tpu.dot_dimension_numbers<[2], [1], [1], [2], [0, 0, 0, 1, 1, 2], [0], [0]>} : vector<4x8x32xf32>, vector<4x32x8xf32>, vector<4x8x8xf32> -> vector<4x8x8xf32>
    %cst_5 = arith.constant 0.176776692 : f32
    %3 = vector.broadcast %cst_5 : f32 to vector<4x8x8xf32>
    %4 = arith.mulf %2, %3 : vector<4x8x8xf32>
    %c0_6 = arith.constant 0 : index
    %c0_7 = arith.constant 0 : index
    %5 = vector.load %arg5[%c0_6, %c0_7] : memref<8x8xi8, #tpu.memory_space<vmem>>, vector<8x8xi8>
    %6 = vector.shape_cast %5 : vector<8x8xi8> to vector<1x8x8xi8>
    %c0_i8 = arith.constant 0 : i8
    %7 = vector.broadcast %c0_i8 : i8 to vector<1x8x8xi8>
    %8 = arith.cmpi ne, %6, %7 : vector<1x8x8xi8>
    %cst_8 = arith.constant -1.000000e+09 : f32
    %9 = vector.shape_cast %8 : vector<1x8x8xi1> to vector<1x8x8xi1>
    %10 = vector.broadcast %9 : vector<1x8x8xi1> to vector<4x8x8xi1>
    %11 = vector.broadcast %cst_8 : f32 to vector<4x8x8xf32>
    %12 = arith.select %10, %11, %4 : vector<4x8x8xi1>, vector<4x8x8xf32>
    %cst_9 = arith.constant dense<0xFF800000> : vector<4x8xf32>
    %13 = vector.multi_reduction <maximumf>, %12, %cst_9 [2] : vector<4x8x8xf32> to vector<4x8xf32>
    %14 = vector.shape_cast %13 : vector<4x8xf32> to vector<4x8x1xf32>
    %15 = vector.broadcast %14 : vector<4x8x1xf32> to vector<4x8x8xf32>
    %16 = arith.subf %12, %15 : vector<4x8x8xf32>
    %17 = math.exp %16 : vector<4x8x8xf32>
    %cst_10 = arith.constant dense<0.000000e+00> : vector<4x8xf32>
    %18 = vector.multi_reduction <add>, %17, %cst_10 [2] : vector<4x8x8xf32> to vector<4x8xf32>
    %19 = vector.shape_cast %18 : vector<4x8xf32> to vector<4x8x1xf32>
    %20 = tpu.reciprocal %19 {approx = true} : vector<4x8x1xf32> -> vector<4x8x1xf32>
    %21 = arith.mulf %19, %20 : vector<4x8x1xf32>
    %cst_11 = arith.constant 2.000000e+00 : f32
    %22 = vector.broadcast %cst_11 : f32 to vector<4x8x1xf32>
    %23 = arith.subf %22, %21 : vector<4x8x1xf32>
    %24 = arith.mulf %20, %23 : vector<4x8x1xf32>
    %25 = vector.broadcast %24 : vector<4x8x1xf32> to vector<4x8x8xf32>
    %26 = arith.mulf %17, %25 : vector<4x8x8xf32>
    %c0_12 = arith.constant 0 : index
    %c0_13 = arith.constant 0 : index
    %c0_14 = arith.constant 0 : index
    %27 = vector.load %arg7[%c0_12, %c0_13, %c0_14] : memref<4x8x8xf32, #tpu.memory_space<vmem>>, vector<4x8x8xf32>
    tpu.vector_store %arg7[%c0_12, %c0_13, %c0_14], %26 {strides = array<i32>} : memref<4x8x8xf32, #tpu.memory_space<vmem>>, vector<4x8x8xf32>,
    %28 = arith.mulf %19, %24 : vector<4x8x1xf32>
    %c0_15 = arith.constant 0 : index
    %c0_16 = arith.constant 0 : index
    %c0_17 = arith.constant 0 : index
    %29 = vector.load %arg4[%c0_15, %c0_16, %c0_17] : memref<4x1x32xf32, #tpu.memory_space<vmem>>, vector<4x1x32xf32>
    %30 = vector.broadcast %28 : vector<4x8x1xf32> to vector<4x8x32xf32>
    %31 = vector.broadcast %29 : vector<4x1x32xf32> to vector<4x8x32xf32>
    %32 = arith.mulf %30, %31 : vector<4x8x32xf32>
    %c0_18 = arith.constant 0 : index
    %c0_19 = arith.constant 0 : index
    %c0_20 = arith.constant 0 : index
    %33 = vector.load %arg6[%c0_18, %c0_19, %c0_20] : memref<4x8x32xf32, #tpu.memory_space<vmem>>, vector<4x8x32xf32>
    tpu.vector_store %arg6[%c0_18, %c0_19, %c0_20], %32 {strides = array<i32>} : memref<4x8x32xf32, #tpu.memory_space<vmem>>, vector<4x8x32xf32>,
    return
  }
  func.func @transform_0(%arg0: i32, %arg1: i32) -> (i32, i32, i32) {
    %c0_i32 = arith.constant 0 : i32
    %c0_i32_0 = arith.constant 0 : i32
    return %arg0, %arg1, %c0_i32 : i32, i32, i32
  }
  func.func @transform_1(%arg0: i32, %arg1: i32) -> (i32, i32, i32) {
    %c0_i32 = arith.constant 0 : i32
    %c0_i32_0 = arith.constant 0 : i32
    %c0_i32_1 = arith.constant 0 : i32
    return %arg0, %c0_i32, %c0_i32_0 : i32, i32, i32
  }
  func.func @transform_2(%arg0: i32, %arg1: i32) -> (i32, i32, i32) {
    %c0_i32 = arith.constant 0 : i32
    %c0_i32_0 = arith.constant 0 : i32
    %c0_i32_1 = arith.constant 0 : i32
    return %arg0, %c0_i32, %c0_i32_0 : i32, i32, i32
  }
  func.func @transform_3(%arg0: i32, %arg1: i32) -> (i32, i32) {
    %c0_i32 = arith.constant 0 : i32
    %c0_i32_0 = arith.constant 0 : i32
    return %arg1, %c0_i32 : i32, i32
  }
  func.func @transform_4(%arg0: i32, %arg1: i32) -> (i32, i32, i32) {
    %c0_i32 = arith.constant 0 : i32
    %c0_i32_0 = arith.constant 0 : i32
    return %arg0, %arg1, %c0_i32 : i32, i32, i32
  }
  func.func @transform_5(%arg0: i32, %arg1: i32) -> (i32, i32, i32) {
    %c0_i32 = arith.constant 0 : i32
    %c0_i32_0 = arith.constant 0 : i32
    return %arg0, %arg1, %c0_i32 : i32, i32, i32
  }
}

</mosaic_0001>

<llo_original>
// kernel: tpu_custom_call.1
$region0: #{tpu_custom_call.1}
  #allocation0 [shape = 'u32[]', space=smem, size = 0x4, offset = 0x4, fixed_abs, tag = 'smem constant byte address 0x4 - core index']
  #allocation1 [shape = 'u32[144,128]{1,0:T(1,128)}', space=vmem, size = 0x12000, scoped, tag = 'internal scratch']
  %s0 = inlined_call_operand.vmem [shape: f32[8,8,32], index: 0, kind: input, shape index: {}]
  %s1 = inlined_call_operand.vmem [shape: f32[8,32,8], index: 1, kind: input, shape index: {}]
  %s2 = inlined_call_operand.vmem [shape: f32[8,1,32], index: 2, kind: input, shape index: {}]
  %s3 = inlined_call_operand.vmem [shape: s8[8,8], index: 3, kind: input, shape index: {}]
  %s4 = inlined_call_operand.hbm [shape: f32[8,8,32], index: 4, kind: output, shape index: {0}]
  %s5 = inlined_call_operand.hbm [shape: f32[8,8,8], index: 5, kind: output, shape index: {1}]
  %6 = xla_tuple %s4, %s5
  %s7 = sld [smem:[#allocation0]]
  $region57: #{tpu_custom_call.1} parent=0
    _
  %s9 = ssub.s32 1, %s7
  %s10 = scalar_select 0, %s9, %s7
  $region1: #{tpu_custom_call.1} parent=0
    #allocation2 [shape = 'u8[32768]{0}', space=vmem, size = 0x8000, scoped, tag = 'output window, operand 0']
    #allocation3 [shape = 's32[2]{0}', space=sflag, size = 0x8, scoped, tag = 'scoped memory for tpu_custom_call.1']
    #allocation4 [shape = 'u8[32768]{0}', space=vmem, size = 0x8000, scoped, tag = 'output window, operand 1']
    #allocation5 [shape = 's32[2]{0}', space=sflag, size = 0x8, scoped, tag = 'scoped memory for tpu_custom_call.1']
    %11 = vsyncpa [#allocation3], 0
    %s12 = scalar_lea.sflag [#allocation3], 1
    %13 = vsyncpa %s12, 0
    %14 = vsyncpa [#allocation5], 0
    %s15 = scalar_lea.sflag [#allocation5], 1
    %16 = vsyncpa %s15, 0
    loop: start=0, step=1, limit=4
    $region2: #{tpu_custom_call.1} parent=1 // loop_pre_header
      _
    $region3: #{tpu_custom_call.1} parent=1 // loop_header
      %s18 = sphi 0, %s22
      %p19 = scmp.ge.s32.totalorder %s18, 4
      %s25 = sphi 0, %s37
      %s26 = sphi 0, %s33
      %s27 = sphi 0, %s25
      %s28 = sphi 0, %s26
      %s29 = sphi 0, %s27
      %s30 = sphi 0, %s28
      %s42 = sphi 0, %s44
      %s45 = sphi 0, %s42
      %s46 = sphi 0, %s45
      %s62 = sphi 0, %s46
      %s68 = sphi 0, %s70
      %s71 = sphi 0, %s68
      %s72 = sphi 0, %s71
      %s88 = sphi 0, %s72
      %s94 = sphi 0, %s96
      %s97 = sphi 0, %s94
      %s98 = sphi 0, %s97
      %s114 = sphi 0, %s98
      %s120 = sphi 0, %s122
      %s123 = sphi 0, %s120
      %s124 = sphi 0, %s123
      %s140 = sphi 0, %s124
      %s148 = sphi 0, %s150
      %s151 = sphi 0, %s148
      %s152 = sphi 0, %s151
      %s168 = sphi 0, %s152
      %s176 = sphi 0, %s178
      %s179 = sphi 0, %s176
      %s180 = sphi 0, %s179
      %s196 = sphi 0, %s180
    $region4: #{tpu_custom_call.1} parent=1 // loop_header_branch
      %21 = sbr.rel (%p19) target = $region8
    $region5: #{tpu_custom_call.1} parent=1 // loop_body
      %s23 = ssub.s32 %s18, 1
      %s24 = ssub.s32 %s18, 2
      %s31 = sadd.s32 1, %s26
      %p32 = scmp.ge.s32.totalorder %s31, 1
      %s33 = scalar_select %p32, 0, %s31
      %s34 = sadd.s32 1, %s25
      %s35 = scalar_select %p32, %s34, %s25
      %p36 = scmp.ge.s32.totalorder %s35, 2
      %s37 = scalar_select %p36, 0, %s35
      %s38 = ssub.s32 %s25, %s37
      %s39 = ssub.s32 %s26, %s33
      %s40 = sor.u32 %s38, %s39
      %p41 = scmp.eq.s32.totalorder %s40, 0
      %s43 = sadd.s32 %s42, 1
      %s44 = scalar_select %p41, %s42, %s43
      %p47 = pneg %p41
      %p48 = scmp.eq.s32.totalorder %s18, 1
      %p49 = por %p47, %p48
      %p50 = scmp.ne.s32.totalorder %s42, %s45
      %p51 = scmp.eq.s32.totalorder %s18, 0
      %p52 = por %p50, %p51
      %p53 = scmp.ne.s32.totalorder %s42, %s45
      %p54 = scmp.eq.s32.totalorder %s23, 1
      %p55 = por %p53, %p54
      %p56 = scmp.ne.s32.totalorder %s45, %s46
      %p57 = scmp.eq.s32.totalorder %s23, 0
      %p58 = por %p56, %p57
      %p59 = scmp.ne.s32.totalorder %s45, %s46
      %p60 = scmp.eq.s32.totalorder %s24, 1
      %p61 = por %p59, %p60
      %p63 = scmp.ne.s32.totalorder %s46, %s62
      %p64 = scmp.eq.s32.totalorder %s24, 0
      %p65 = por %p63, %p64
      %s66 = ssub.s32 %s25, %s37
      %p67 = scmp.eq.s32.totalorder %s66, 0
      %s69 = sadd.s32 %s68, 1
      %s70 = scalar_select %p67, %s68, %s69
      %p73 = pneg %p67
      %p74 = scmp.eq.s32.totalorder %s18, 1
      %p75 = por %p73, %p74
      %p76 = scmp.ne.s32.totalorder %s68, %s71
      %p77 = scmp.eq.s32.totalorder %s18, 0
      %p78 = por %p76, %p77
      %p79 = scmp.ne.s32.totalorder %s68, %s71
      %p80 = scmp.eq.s32.totalorder %s23, 1
      %p81 = por %p79, %p80
      %p82 = scmp.ne.s32.totalorder %s71, %s72
      %p83 = scmp.eq.s32.totalorder %s23, 0
      %p84 = por %p82, %p83
      %p85 = scmp.ne.s32.totalorder %s71, %s72
      %p86 = scmp.eq.s32.totalorder %s24, 1
      %p87 = por %p85, %p86
      %p89 = scmp.ne.s32.totalorder %s72, %s88
      %p90 = scmp.eq.s32.totalorder %s24, 0
      %p91 = por %p89, %p90
      %s92 = ssub.s32 %s25, %s37
      %p93 = scmp.eq.s32.totalorder %s92, 0
      %s95 = sadd.s32 %s94, 1
      %s96 = scalar_select %p93, %s94, %s95
      %p99 = pneg %p93
      %p100 = scmp.eq.s32.totalorder %s18, 1
      %p101 = por %p99, %p100
      %p102 = scmp.ne.s32.totalorder %s94, %s97
      %p103 = scmp.eq.s32.totalorder %s18, 0
      %p104 = por %p102, %p103
      %p105 = scmp.ne.s32.totalorder %s94, %s97
      %p106 = scmp.eq.s32.totalorder %s23, 1
      %p107 = por %p105, %p106
      %p108 = scmp.ne.s32.totalorder %s97, %s98
      %p109 = scmp.eq.s32.totalorder %s23, 0
      %p110 = por %p108, %p109
      %p111 = scmp.ne.s32.totalorder %s97, %s98
      %p112 = scmp.eq.s32.totalorder %s24, 1
      %p113 = por %p111, %p112
      %p115 = scmp.ne.s32.totalorder %s98, %s114
      %p116 = scmp.eq.s32.totalorder %s24, 0
      %p117 = por %p115, %p116
      %s118 = ssub.s32 %s26, %s33
      %p119 = scmp.eq.s32.totalorder %s118, 0
      %s121 = sadd.s32 %s120, 1
      %s122 = scalar_select %p119, %s120, %s121
      %p125 = pneg %p119
      %p126 = scmp.eq.s32.totalorder %s18, 1
      %p127 = por %p125, %p126
      %p128 = scmp.ne.s32.totalorder %s120, %s123
      %p129 = scmp.eq.s32.totalorder %s18, 0
      %p130 = por %p128, %p129
      %p131 = scmp.ne.s32.totalorder %s120, %s123
      %p132 = scmp.eq.s32.totalorder %s23, 1
      %p133 = por %p131, %p132
      %p134 = scmp.ne.s32.totalorder %s123, %s124
      %p135 = scmp.eq.s32.totalorder %s23, 0
      %p136 = por %p134, %p135
      %p137 = scmp.ne.s32.totalorder %s123, %s124
      %p138 = scmp.eq.s32.totalorder %s24, 1
      %p139 = por %p137, %p138
      %p141 = scmp.ne.s32.totalorder %s124, %s140
      %p142 = scmp.eq.s32.totalorder %s24, 0
      %p143 = por %p141, %p142
      %s144 = ssub.s32 %s25, %s37
      %s145 = ssub.s32 %s26, %s33
      %s146 = sor.u32 %s144, %s145
      %p147 = scmp.eq.s32.totalorder %s146, 0
      %s149 = sadd.s32 %s148, 1
      %s150 = scalar_select %p147, %s148, %s149
      %p153 = pneg %p147
      %p154 = scmp.eq.s32.totalorder %s18, 1
      %p155 = por %p153, %p154
      %p156 = scmp.ne.s32.totalorder %s148, %s151
      %p157 = scmp.eq.s32.totalorder %s18, 0
      %p158 = por %p156, %p157
      %p159 = scmp.ne.s32.totalorder %s148, %s151
      %p160 = scmp.eq.s32.totalorder %s23, 1
      %p161 = por %p159, %p160
      %p162 = scmp.ne.s32.totalorder %s151, %s152
      %p163 = scmp.eq.s32.totalorder %s23, 0
      %p164 = por %p162, %p163
      %p165 = scmp.ne.s32.totalorder %s151, %s152
      %p166 = scmp.eq.s32.totalorder %s24, 1
      %p167 = por %p165, %p166
      %p169 = scmp.ne.s32.totalorder %s152, %s168
      %p170 = scmp.eq.s32.totalorder %s24, 0
      %p171 = por %p169, %p170
      %s172 = ssub.s32 %s25, %s37
      %s173 = ssub.s32 %s26, %s33
      %s174 = sor.u32 %s172, %s173
      %p175 = scmp.eq.s32.totalorder %s174, 0
      %s177 = sadd.s32 %s176, 1
      %s178 = scalar_select %p175, %s176, %s177
      %p181 = pneg %p175
      %p182 = scmp.eq.s32.totalorder %s18, 1
      %p183 = por %p181, %p182
      %p184 = scmp.ne.s32.totalorder %s176, %s179
      %p185 = scmp.eq.s32.totalorder %s18, 0
      %p186 = por %p184, %p185
      %p187 = scmp.ne.s32.totalorder %s176, %s179
      %p188 = scmp.eq.s32.totalorder %s23, 1
      %p189 = por %p187, %p188
      %p190 = scmp.ne.s32.totalorder %s179, %s180
      %p191 = scmp.eq.s32.totalorder %s23, 0
      %p192 = por %p190, %p191
      %p193 = scmp.ne.s32.totalorder %s179, %s180
      %p194 = scmp.eq.s32.totalorder %s24, 1
      %p195 = por %p193, %p194
      %p197 = scmp.ne.s32.totalorder %s180, %s196
      %p198 = scmp.eq.s32.totalorder %s24, 0
      %p199 = por %p197, %p198
      %p200 = scmp.le.s32.totalorder 1, %s18
      %p201 = scmp.lt.s32.totalorder %s18, 3
      %p202 = pnand %p200, %p201
      %p203 = pneg %p202
      // Predicated region
      $region9: #{tpu_custom_call.1} parent=5 // pred_check
        _
      $region10: #{tpu_custom_call.1} parent=5 // pred_check_branch
        %205 = sbr.rel (%p202) target = $region12
      $region11: #{tpu_custom_call.1} parent=5 // pred_region
        %s206 = ssub.s32 %s18, 1
        // Predicated region
        $region13: #{tpu_custom_call.1} parent=11 // pred_check
          %p207 = pneg %p136
        $region14: #{tpu_custom_call.1} parent=11 // pred_check_branch
          %209 = sbr.rel (%p207) target = $region16
        $region15: #{tpu_custom_call.1} parent=11 // pred_region
          %p210 = scmp.lt.s32.totalorder %s28, 0
          %s211 = scalar_select %p210, %s28, 0
          %s212 = smul.addr %s211, 2
          %s213 = scalar_lea.vmem %s3, %s212
        $region16: #{tpu_custom_call.1} parent=11 // pred_fallthru
          _
      $region12: #{tpu_custom_call.1} parent=5 // pred_fallthru
        _
      %p214 = scmp.lt.s32.totalorder %s18, 2
      // Predicated region
      $region17: #{tpu_custom_call.1} parent=5 // pred_check
        %p215 = pneg %p214
      $region18: #{tpu_custom_call.1} parent=5 // pred_check_branch
        %217 = sbr.rel (%p215) target = $region20
      $region19: #{tpu_custom_call.1} parent=5 // pred_region
        // Predicated region
        $region21: #{tpu_custom_call.1} parent=19 // pred_check
          %p218 = pneg %p52
        $region22: #{tpu_custom_call.1} parent=19 // pred_check_branch
          %220 = sbr.rel (%p218) target = $region24
        $region23: #{tpu_custom_call.1} parent=19 // pred_region
          %s221 = smul.u32 4, %s25
          %p222 = scmp.lt.s32.totalorder %s221, 7
          %s223 = scalar_select %p222, %s221, 7
          %p224 = scmp.lt.s32.totalorder %s26, 0
          %s225 = scalar_select %p224, %s26, 0
          %s226 = sadd.s32 %s225, %s223
          %s227 = smul.addr %s226, 8
          %s228 = scalar_lea.vmem %s0, %s227
          %s229 = smul.u32 4, %s25
        $region24: #{tpu_custom_call.1} parent=19 // pred_fallthru
          _
        // Predicated region
        $region25: #{tpu_custom_call.1} parent=19 // pred_check
          %p230 = pneg %p78
        $region26: #{tpu_custom_call.1} parent=19 // pred_check_branch
          %232 = sbr.rel (%p230) target = $region28
        $region27: #{tpu_custom_call.1} parent=19 // pred_region
          %s233 = smul.u32 4, %s25
          %p234 = scmp.lt.s32.totalorder %s233, 7
          %s235 = scalar_select %p234, %s233, 7
          %s236 = smul.addr %s235, 4
          %s237 = smul.addr %s236, 8
          %s238 = scalar_lea.vmem %s1, %s237
          %s239 = smul.u32 4, %s25
        $region28: #{tpu_custom_call.1} parent=19 // pred_fallthru
          _
        // Predicated region
        $region29: #{tpu_custom_call.1} parent=19 // pred_check
          %p240 = pneg %p104
        $region30: #{tpu_custom_call.1} parent=19 // pred_check_branch
          %242 = sbr.rel (%p240) target = $region32
        $region31: #{tpu_custom_call.1} parent=19 // pred_region
          %s243 = smul.u32 4, %s25
          %p244 = scmp.lt.s32.totalorder %s243, 7
          %s245 = scalar_select %p244, %s243, 7
          %s246 = scalar_lea.vmem %s2, %s245
          %s247 = smul.u32 4, %s25
        $region32: #{tpu_custom_call.1} parent=19 // pred_fallthru
          _
      $region20: #{tpu_custom_call.1} parent=5 // pred_fallthru
        _
      %p248 = scmp.le.s32.totalorder 1, %s18
      %p249 = scmp.lt.s32.totalorder %s18, 3
      %p250 = pnand %p248, %p249
      %p251 = pneg %p250
      // Predicated region
      $region33: #{tpu_custom_call.1} parent=5 // pred_check
        _
      $region34: #{tpu_custom_call.1} parent=5 // pred_check_branch
        %253 = sbr.rel (%p250) target = $region36
      $region35: #{tpu_custom_call.1} parent=5 // pred_region
        %s254 = ssub.s32 %s18, 1
        %s255 = smul.u32 4, %s27
        %p256 = scmp.lt.s32.totalorder %s255, 7
        %s257 = scalar_select %p256, %s255, 7
        %p258 = scmp.lt.s32.totalorder %s28, 0
        %s259 = scalar_select %p258, %s28, 0
        %s260 = sadd.s32 %s259, %s257
        %s261 = smul.addr %s260, 8
        %s262 = scalar_lea.vmem %s0, %s261
        %p263 = pneg %p58
        %p264 = pneg %p55
        %s265 = smul.u32 4, %s27
        %p266 = scmp.lt.s32.totalorder %s265, 7
        %s267 = scalar_select %p266, %s265, 7
        %s268 = smul.addr %s267, 4
        %s269 = smul.addr %s268, 8
        %s270 = scalar_lea.vmem %s1, %s269
        %p271 = pneg %p84
        %p272 = pneg %p81
        %s273 = smul.u32 4, %s27
        %p274 = scmp.lt.s32.totalorder %s273, 7
        %s275 = scalar_select %p274, %s273, 7
        %s276 = scalar_lea.vmem %s2, %s275
        %p277 = pneg %p110
        %p278 = pneg %p107
        %p279 = scmp.lt.s32.totalorder %s28, 0
        %s280 = scalar_select %p279, %s28, 0
        %s281 = smul.addr %s280, 2
        %s282 = scalar_lea.vmem %s3, %s281
        %p283 = pneg %p136
        %p284 = pneg %p133
        %p285 = pneg %p164
        %p286 = pneg %p161
        %s287 = sand.u32 %s151, 1
        %s288 = scalar_lea.sflag [#allocation3], %s287
        %s289 = sand.u32 %s151, 1
        %s290 = smul.addr %s289, 32
        %s291 = scalar_lea.vmem [#allocation2], %s290
        %p292 = pneg %p192
        %p293 = pneg %p189
        %s294 = sand.u32 %s179, 1
        %s295 = scalar_lea.sflag [#allocation5], %s294
        %s296 = sand.u32 %s179, 1
        %s297 = smul.addr %s296, 32
        %s298 = scalar_lea.vmem [#allocation4], %s297
        %s299 = smul.u32 4, %s27
        %p300 = scmp.lt.s32.totalorder %s299, 7
        %s301 = scalar_select %p300, %s299, 7
        %p302 = scmp.lt.s32.totalorder %s28, 0
        %s303 = scalar_select %p302, %s28, 0
        %s304 = sadd.s32 %s303, %s301
        %s305 = smul.addr %s304, 8
        %s306 = scalar_lea.vmem %s0, %s305
        %s307 = smul.u32 4, %s27
        %s308 = smul.u32 4, %s27
        %p309 = scmp.lt.s32.totalorder %s308, 7
        %s310 = scalar_select %p309, %s308, 7
        %s311 = smul.addr %s310, 4
        %s312 = smul.addr %s311, 8
        %s313 = scalar_lea.vmem %s1, %s312
        %s314 = smul.u32 4, %s27
        %s315 = smul.u32 4, %s27
        %p316 = scmp.lt.s32.totalorder %s315, 7
        %s317 = scalar_select %p316, %s315, 7
        %s318 = scalar_lea.vmem %s2, %s317
        %s319 = smul.u32 4, %s27
        %p320 = scmp.lt.s32.totalorder %s28, 0
        %s321 = scalar_select %p320, %s28, 0
        %s322 = smul.addr %s321, 2
        %s323 = scalar_lea.vmem %s3, %s322
        %s324 = smul.u32 4, %s27
        %s325 = smul.u32 4, %s27
        %v328 = vld [vmem:[%s306] sm:$0xff]
        %v329 = vld [vmem:[%s306 + $0x8] sm:$0xff]
        %v330 = vld [vmem:[%s306 + $0x10] sm:$0xff]
        %v331 = vld [vmem:[%s306 + $0x18] sm:$0xff]
        %v332 = vld [vmem:[%s313] sm:$0xff]
        %v333 = vld [vmem:[%s313 + $0x8] sm:$0xff]
        %v334 = vld [vmem:[%s313 + $0x10] sm:$0xff]
        %v335 = vld [vmem:[%s313 + $0x18] sm:$0xff]
        %v336 = vld [vmem:[%s313 + $0x20] sm:$0xff]
        %v337 = vld [vmem:[%s313 + $0x28] sm:$0xff]
        %v338 = vld [vmem:[%s313 + $0x30] sm:$0xff]
        %v339 = vld [vmem:[%s313 + $0x38] sm:$0xff]
        %v340 = vld [vmem:[%s313 + $0x40] sm:$0xff]
        %v341 = vld [vmem:[%s313 + $0x48] sm:$0xff]
        %v342 = vld [vmem:[%s313 + $0x50] sm:$0xff]
        %v343 = vld [vmem:[%s313 + $0x58] sm:$0xff]
        %v344 = vld [vmem:[%s313 + $0x60] sm:$0xff]
        %v345 = vld [vmem:[%s313 + $0x68] sm:$0xff]
        %v346 = vld [vmem:[%s313 + $0x70] sm:$0xff]
        %v347 = vld [vmem:[%s313 + $0x78] sm:$0xff]
        %vm348 = vcmask 261120
        %v350 = vsel %vm348, %v328, 0
        %352 = vmatprep.subr.mxu0 0.0
        %353 = vmatpush1.msra.mxu0 0.0
        %354 = vmatprep.subr.mxu0 0.0
        %355 = vmatpush1.msra.mxu0 0.0
        %356 = vmatprep.subr.mxu0 0.0
        %357 = vmatpush1.msra.mxu0 0.0
        %358 = vmatprep.subr.mxu0 0.0
        %359 = vmatpush1.msra.mxu0 0.0
        %360 = vmatprep.subr.mxu0 0.0
        %361 = vmatpush1.msra.mxu0 0.0
        %362 = vmatprep.subr.mxu0 0.0
        %363 = vmatpush1.msra.mxu0 0.0
        %364 = vmatprep.subr.mxu0 0.0
        %365 = vmatpush1.msra.mxu0 0.0
        %366 = vmatprep.subr.mxu0 0.0
        %367 = vmatpush1.msra.mxu0 0.0
        %368 = vmatprep.subr.mxu0 0.0
        %369 = vmatpush1.msra.mxu0 0.0
        %370 = vmatprep.subr.mxu0 0.0
        %371 = vmatpush1.msra.mxu0 0.0
        %372 = vmatprep.subr.mxu0 0.0
        %373 = vmatpush1.msra.mxu0 0.0
        %374 = vmatprep.subr.mxu0 0.0
        %375 = vmatpush1.msra.mxu0 0.0
        %376 = vmatprep.subr.mxu0 0.0
        %377 = vmatpush1.msra.mxu0 %v335
        %378 = vmatprep.subr.mxu0 0.0
        %379 = vmatpush1.msra.mxu0 %v334
        %380 = vmatprep.subr.mxu0 0.0
        %381 = vmatpush1.msra.mxu0 %v333
        %382 = vmatprep.subr.mxu0 0.0
        %383 = vmatpush1.msra.mxu0 %v332
        %384 = vmatprep.subr.mxu0 0.0
        %385 = vmatpush2.msra.mxu0 0.0
        %386 = vmatprep.subr.mxu0 0.0
        %387 = vmatpush2.msra.mxu0 0.0
        %388 = vmatprep.subr.mxu0 0.0
        %389 = vmatpush2.msra.mxu0 0.0
        %390 = vmatprep.subr.mxu0 0.0
        %391 = vmatpush2.msra.mxu0 0.0
        %392 = vmatprep.subr.mxu0 0.0
        %393 = vmatpush2.msra.mxu0 0.0
        %394 = vmatprep.subr.mxu0 0.0
        %395 = vmatpush2.msra.mxu0 0.0
        %396 = vmatprep.subr.mxu0 0.0
        %397 = vmatpush2.msra.mxu0 0.0
        %398 = vmatprep.subr.mxu0 0.0
        %399 = vmatpush2.msra.mxu0 0.0
        %400 = vmatprep.subr.mxu0 0.0
        %401 = vmatpush2.msra.mxu0 0.0
        %402 = vmatprep.subr.mxu0 0.0
        %403 = vmatpush2.msra.mxu0 0.0
        %404 = vmatprep.subr.mxu0 0.0
        %405 = vmatpush2.msra.mxu0 0.0
        %406 = vmatprep.subr.mxu0 0.0
        %407 = vmatpush2.msra.mxu0 0.0
        %408 = vmatprep.subr.mxu0 0.0
        %409 = vmatpush2.msra.mxu0 0.0
        %410 = vmatprep.subr.mxu0 0.0
        %411 = vmatpush2.msra.mxu0 0.0
        %412 = vmatprep.subr.mxu0 0.0
        %413 = vmatpush2.msra.mxu0 0.0
        %414 = vmatprep.subr.mxu0 0.0
        %415 = vmatpush2.msra.mxu0 0.0
        %416 = vmatprep.mubr.f32.mxu0 0.0
        %417 = vmatmul.mubr.f32.gmra.mxu0 %v350
        %v418 = vpop.f32.mrf.mxu0
        %v419 = vadd.f32 0.0, %v418
        %v420 = vpop.f32.mrf.mxu0
        %421 = vdwg.mxu0
        %v423 = vsel %vm348, %v329, 0
        %425 = vmatprep.subr.mxu0 0.0
        %426 = vmatpush1.msra.mxu0 0.0
        %427 = vmatprep.subr.mxu0 0.0
        %428 = vmatpush1.msra.mxu0 0.0
        %429 = vmatprep.subr.mxu0 0.0
        %430 = vmatpush1.msra.mxu0 0.0
        %431 = vmatprep.subr.mxu0 0.0
        %432 = vmatpush1.msra.mxu0 0.0
        %433 = vmatprep.subr.mxu0 0.0
        %434 = vmatpush1.msra.mxu0 0.0
        %435 = vmatprep.subr.mxu0 0.0
        %436 = vmatpush1.msra.mxu0 0.0
        %437 = vmatprep.subr.mxu0 0.0
        %438 = vmatpush1.msra.mxu0 0.0
        %439 = vmatprep.subr.mxu0 0.0
        %440 = vmatpush1.msra.mxu0 0.0
        %441 = vmatprep.subr.mxu0 0.0
        %442 = vmatpush1.msra.mxu0 0.0
        %443 = vmatprep.subr.mxu0 0.0
        %444 = vmatpush1.msra.mxu0 0.0
        %445 = vmatprep.subr.mxu0 0.0
        %446 = vmatpush1.msra.mxu0 0.0
        %447 = vmatprep.subr.mxu0 0.0
        %448 = vmatpush1.msra.mxu0 0.0
        %449 = vmatprep.subr.mxu0 0.0
        %450 = vmatpush1.msra.mxu0 %v339
        %451 = vmatprep.subr.mxu0 0.0
        %452 = vmatpush1.msra.mxu0 %v338
        %453 = vmatprep.subr.mxu0 0.0
        %454 = vmatpush1.msra.mxu0 %v337
        %455 = vmatprep.subr.mxu0 0.0
        %456 = vmatpush1.msra.mxu0 %v336
        %457 = vmatprep.subr.mxu0 0.0
        %458 = vmatpush2.msra.mxu0 0.0
        %459 = vmatprep.subr.mxu0 0.0
        %460 = vmatpush2.msra.mxu0 0.0
        %461 = vmatprep.subr.mxu0 0.0
        %462 = vmatpush2.msra.mxu0 0.0
        %463 = vmatprep.subr.mxu0 0.0
        %464 = vmatpush2.msra.mxu0 0.0
        %465 = vmatprep.subr.mxu0 0.0
        %466 = vmatpush2.msra.mxu0 0.0
        %467 = vmatprep.subr.mxu0 0.0
        %468 = vmatpush2.msra.mxu0 0.0
        %469 = vmatprep.subr.mxu0 0.0
        %470 = vmatpush2.msra.mxu0 0.0
        %471 = vmatprep.subr.mxu0 0.0
        %472 = vmatpush2.msra.mxu0 0.0
        %473 = vmatprep.subr.mxu0 0.0
        %474 = vmatpush2.msra.mxu0 0.0
        %475 = vmatprep.subr.mxu0 0.0
        %476 = vmatpush2.msra.mxu0 0.0
        %477 = vmatprep.subr.mxu0 0.0
        %478 = vmatpush2.msra.mxu0 0.0
        %479 = vmatprep.subr.mxu0 0.0
        %480 = vmatpush2.msra.mxu0 0.0
        %481 = vmatprep.subr.mxu0 0.0
        %482 = vmatpush2.msra.mxu0 0.0
        %483 = vmatprep.subr.mxu0 0.0
        %484 = vmatpush2.msra.mxu0 0.0
        %485 = vmatprep.subr.mxu0 0.0
        %486 = vmatpush2.msra.mxu0 0.0
        %487 = vmatprep.subr.mxu0 0.0
        %488 = vmatpush2.msra.mxu0 0.0
        %489 = vmatprep.mubr.f32.mxu0 0.0
        %490 = vmatmul.mubr.f32.gmra.mxu0 %v423
        %v491 = vpop.f32.mrf.mxu0
        %v492 = vadd.f32 0.0, %v491
        %v493 = vpop.f32.mrf.mxu0
        %494 = vdwg.mxu0
        %v496 = vsel %vm348, %v330, 0
        %498 = vmatprep.subr.mxu0 0.0
        %499 = vmatpush1.msra.mxu0 0.0
        %500 = vmatprep.subr.mxu0 0.0
        %501 = vmatpush1.msra.mxu0 0.0
        %502 = vmatprep.subr.mxu0 0.0
        %503 = vmatpush1.msra.mxu0 0.0
        %504 = vmatprep.subr.mxu0 0.0
        %505 = vmatpush1.msra.mxu0 0.0
        %506 = vmatprep.subr.mxu0 0.0
        %507 = vmatpush1.msra.mxu0 0.0
        %508 = vmatprep.subr.mxu0 0.0
        %509 = vmatpush1.msra.mxu0 0.0
        %510 = vmatprep.subr.mxu0 0.0
        %511 = vmatpush1.msra.mxu0 0.0
        %512 = vmatprep.subr.mxu0 0.0
        %513 = vmatpush1.msra.mxu0 0.0
        %514 = vmatprep.subr.mxu0 0.0
        %515 = vmatpush1.msra.mxu0 0.0
        %516 = vmatprep.subr.mxu0 0.0
        %517 = vmatpush1.msra.mxu0 0.0
        %518 = vmatprep.subr.mxu0 0.0
        %519 = vmatpush1.msra.mxu0 0.0
        %520 = vmatprep.subr.mxu0 0.0
        %521 = vmatpush1.msra.mxu0 0.0
        %522 = vmatprep.subr.mxu0 0.0
        %523 = vmatpush1.msra.mxu0 %v343
        %524 = vmatprep.subr.mxu0 0.0
        %525 = vmatpush1.msra.mxu0 %v342
        %526 = vmatprep.subr.mxu0 0.0
        %527 = vmatpush1.msra.mxu0 %v341
        %528 = vmatprep.subr.mxu0 0.0
        %529 = vmatpush1.msra.mxu0 %v340
        %530 = vmatprep.subr.mxu0 0.0
        %531 = vmatpush2.msra.mxu0 0.0
        %532 = vmatprep.subr.mxu0 0.0
        %533 = vmatpush2.msra.mxu0 0.0
        %534 = vmatprep.subr.mxu0 0.0
        %535 = vmatpush2.msra.mxu0 0.0
        %536 = vmatprep.subr.mxu0 0.0
        %537 = vmatpush2.msra.mxu0 0.0
        %538 = vmatprep.subr.mxu0 0.0
        %539 = vmatpush2.msra.mxu0 0.0
        %540 = vmatprep.subr.mxu0 0.0
        %541 = vmatpush2.msra.mxu0 0.0
        %542 = vmatprep.subr.mxu0 0.0
        %543 = vmatpush2.msra.mxu0 0.0
        %544 = vmatprep.subr.mxu0 0.0
        %545 = vmatpush2.msra.mxu0 0.0
        %546 = vmatprep.subr.mxu0 0.0
        %547 = vmatpush2.msra.mxu0 0.0
        %548 = vmatprep.subr.mxu0 0.0
        %549 = vmatpush2.msra.mxu0 0.0
        %550 = vmatprep.subr.mxu0 0.0
        %551 = vmatpush2.msra.mxu0 0.0
        %552 = vmatprep.subr.mxu0 0.0
        %553 = vmatpush2.msra.mxu0 0.0
        %554 = vmatprep.subr.mxu0 0.0
        %555 = vmatpush2.msra.mxu0 0.0
        %556 = vmatprep.subr.mxu0 0.0
        %557 = vmatpush2.msra.mxu0 0.0
        %558 = vmatprep.subr.mxu0 0.0
        %559 = vmatpush2.msra.mxu0 0.0
        %560 = vmatprep.subr.mxu0 0.0
        %561 = vmatpush2.msra.mxu0 0.0
        %562 = vmatprep.mubr.f32.mxu0 0.0
        %563 = vmatmul.mubr.f32.gmra.mxu0 %v496
        %v564 = vpop.f32.mrf.mxu0
        %v565 = vadd.f32 0.0, %v564
        %v566 = vpop.f32.mrf.mxu0
        %567 = vdwg.mxu0
        %v569 = vsel %vm348, %v331, 0
        %571 = vmatprep.subr.mxu0 0.0
        %572 = vmatpush1.msra.mxu0 0.0
        %573 = vmatprep.subr.mxu0 0.0
        %574 = vmatpush1.msra.mxu0 0.0
        %575 = vmatprep.subr.mxu0 0.0
        %576 = vmatpush1.msra.mxu0 0.0
        %577 = vmatprep.subr.mxu0 0.0
        %578 = vmatpush1.msra.mxu0 0.0
        %579 = vmatprep.subr.mxu0 0.0
        %580 = vmatpush1.msra.mxu0 0.0
        %581 = vmatprep.subr.mxu0 0.0
        %582 = vmatpush1.msra.mxu0 0.0
        %583 = vmatprep.subr.mxu0 0.0
        %584 = vmatpush1.msra.mxu0 0.0
        %585 = vmatprep.subr.mxu0 0.0
        %586 = vmatpush1.msra.mxu0 0.0
        %587 = vmatprep.subr.mxu0 0.0
        %588 = vmatpush1.msra.mxu0 0.0
        %589 = vmatprep.subr.mxu0 0.0
        %590 = vmatpush1.msra.mxu0 0.0
        %591 = vmatprep.subr.mxu0 0.0
        %592 = vmatpush1.msra.mxu0 0.0
        %593 = vmatprep.subr.mxu0 0.0
        %594 = vmatpush1.msra.mxu0 0.0
        %595 = vmatprep.subr.mxu0 0.0
        %596 = vmatpush1.msra.mxu0 %v347
        %597 = vmatprep.subr.mxu0 0.0
        %598 = vmatpush1.msra.mxu0 %v346
        %599 = vmatprep.subr.mxu0 0.0
        %600 = vmatpush1.msra.mxu0 %v345
        %601 = vmatprep.subr.mxu0 0.0
        %602 = vmatpush1.msra.mxu0 %v344
        %603 = vmatprep.subr.mxu0 0.0
        %604 = vmatpush2.msra.mxu0 0.0
        %605 = vmatprep.subr.mxu0 0.0
        %606 = vmatpush2.msra.mxu0 0.0
        %607 = vmatprep.subr.mxu0 0.0
        %608 = vmatpush2.msra.mxu0 0.0
        %609 = vmatprep.subr.mxu0 0.0
        %610 = vmatpush2.msra.mxu0 0.0
        %611 = vmatprep.subr.mxu0 0.0
        %612 = vmatpush2.msra.mxu0 0.0
        %613 = vmatprep.subr.mxu0 0.0
        %614 = vmatpush2.msra.mxu0 0.0
        %615 = vmatprep.subr.mxu0 0.0
        %616 = vmatpush2.msra.mxu0 0.0
        %617 = vmatprep.subr.mxu0 0.0
        %618 = vmatpush2.msra.mxu0 0.0
        %619 = vmatprep.subr.mxu0 0.0
        %620 = vmatpush2.msra.mxu0 0.0
        %621 = vmatprep.subr.mxu0 0.0
        %622 = vmatpush2.msra.mxu0 0.0
        %623 = vmatprep.subr.mxu0 0.0
        %624 = vmatpush2.msra.mxu0 0.0
        %625 = vmatprep.subr.mxu0 0.0
        %626 = vmatpush2.msra.mxu0 0.0
        %627 = vmatprep.subr.mxu0 0.0
        %628 = vmatpush2.msra.mxu0 0.0
        %629 = vmatprep.subr.mxu0 0.0
        %630 = vmatpush2.msra.mxu0 0.0
        %631 = vmatprep.subr.mxu0 0.0
        %632 = vmatpush2.msra.mxu0 0.0
        %633 = vmatprep.subr.mxu0 0.0
        %634 = vmatpush2.msra.mxu0 0.0
        %635 = vmatprep.mubr.f32.mxu0 0.0
        %636 = vmatmul.mubr.f32.gmra.mxu0 %v569
        %v637 = vpop.f32.mrf.mxu0
        %v638 = vadd.f32 0.0, %v637
        %v639 = vpop.f32.mrf.mxu0
        %640 = vdwg.mxu0
        %v641 = vmul.f32 %v419, 0.17677669
        %v642 = vmul.f32 %v492, 0.17677669
        %v643 = vmul.f32 %v565, 0.17677669
        %v644 = vmul.f32 %v638, 0.17677669
        %v645 = vld [vmem:[%s323] sm:$0x3]
        %vm646 = vnez %v645
        %v647 = vsel %vm646, 16843009, 0
        %v648 = vunpack.c.0.s8 %v647
        %vm649 = vcmp.ne.s32.totalorder %v648, 0
        %v650 = vsel %vm649, 1, 0
        %vm651 = vcmp.eq.s32.totalorder %v650, 1
        %v652 = vsel %vm651, -1e+09, %v641
        %v653 = vsel %vm651, -1e+09, %v642
        %v654 = vsel %vm651, -1e+09, %v643
        %v655 = vsel %vm651, -1e+09, %v644
        %vm656 = vcmask 64512
        %v657 = vsel %vm656, %v652, -inf
        %658 = vmax.xlane.f32.xlu0 %v657
        %v659 = vpop.xlane.xlu0 %658
        %v660 = vsel %vm656, %v653, -inf
        %661 = vmax.xlane.f32.xlu0 %v660
        %v662 = vpop.xlane.xlu0 %661
        %v663 = vsel %vm656, %v654, -inf
        %664 = vmax.xlane.f32.xlu0 %v663
        %v665 = vpop.xlane.xlu0 %664
        %v666 = vsel %vm656, %v655, -inf
        %667 = vmax.xlane.f32.xlu0 %v666
        %v668 = vpop.xlane.xlu0 %667
        %v669 = vsub.f32 %v652, %v659
        %v670 = vsub.f32 %v653, %v662
        %v671 = vsub.f32 %v654, %v665
        %v672 = vsub.f32 %v655, %v668
        %v673 = vmul.f32 %v669, 1.442695
        %v674 = vpow.pop %v673
        %v675 = vmul.f32 %v670, 1.442695
        %v676 = vpow.pop %v675
        %v677 = vmul.f32 %v671, 1.442695
        %v678 = vpow.pop %v677
        %v679 = vmul.f32 %v672, 1.442695
        %v680 = vpow.pop %v679
        %v681 = vsel %vm656, %v674, 0.0
        %682 = vadd.xlane.f32.xlu0 %v681
        %v683 = vpop.xlane.xlu0 %682
        %v684 = vsel %vm656, %v676, 0.0
        %685 = vadd.xlane.f32.xlu0 %v684
        %v686 = vpop.xlane.xlu0 %685
        %v687 = vsel %vm656, %v678, 0.0
        %688 = vadd.xlane.f32.xlu0 %v687
        %v689 = vpop.xlane.xlu0 %688
        %v690 = vsel %vm656, %v680, 0.0
        %691 = vadd.xlane.f32.xlu0 %v690
        %v692 = vpop.xlane.xlu0 %691
        %v693 = vrcp.pop %v683
        %v694 = vrcp.pop %v686
        %v695 = vrcp.pop %v689
        %v696 = vrcp.pop %v692
        %v697 = vmul.f32 %v683, %v693
        %v698 = vmul.f32 %v686, %v694
        %v699 = vmul.f32 %v689, %v695
        %v700 = vmul.f32 %v692, %v696
        %v701 = vsub.f32 2.0, %v697
        %v702 = vsub.f32 2.0, %v698
        %v703 = vsub.f32 2.0, %v699
        %v704 = vsub.f32 2.0, %v700
        %v705 = vmul.f32 %v693, %v701
        %v706 = vmul.f32 %v694, %v702
        %v707 = vmul.f32 %v695, %v703
        %v708 = vmul.f32 %v696, %v704
        %v709 = vmul.f32 %v674, %v705
        %v710 = vmul.f32 %v676, %v706
        %v711 = vmul.f32 %v678, %v707
        %v712 = vmul.f32 %v680, %v708
        %713 = vst.msk [vmem:[%s298] sm:$0xff] %vm656, %v709
        %714 = vst.msk [vmem:[%s298 + $0x8] sm:$0xff] %vm656, %v710
        %715 = vst.msk [vmem:[%s298 + $0x10] sm:$0xff] %vm656, %v711
        %716 = vst.msk [vmem:[%s298 + $0x18] sm:$0xff] %vm656, %v712
        %v717 = vmul.f32 %v683, %v705
        %v718 = vmul.f32 %v686, %v706
        %v719 = vmul.f32 %v689, %v707
        %v720 = vmul.f32 %v692, %v708
        %v721 = vld [vmem:[%s318] sm:$0x1]
        %v722 = vld [vmem:[%s318 + $0x1] sm:$0x1]
        %v723 = vld [vmem:[%s318 + $0x2] sm:$0x1]
        %v724 = vld [vmem:[%s318 + $0x3] sm:$0x1]
        %v729 = vlaneseq
        %v730 = vshrl.u32 %v729, 7
        %v731 = vsub.s32 0, %v730
        %v732 = vrot.slane %v721, %v731
        %v733 = vlaneseq
        %v734 = vshrl.u32 %v733, 7
        %v735 = vsub.s32 0, %v734
        %v736 = vrot.slane %v722, %v735
        %v737 = vlaneseq
        %v738 = vshrl.u32 %v737, 7
        %v739 = vsub.s32 0, %v738
        %v740 = vrot.slane %v723, %v739
        %v741 = vlaneseq
        %v742 = vshrl.u32 %v741, 7
        %v743 = vsub.s32 0, %v742
        %v744 = vrot.slane %v724, %v743
        %v749 = vmul.f32 %v717, %v732
        %v750 = vmul.f32 %v718, %v736
        %v751 = vmul.f32 %v719, %v740
        %v752 = vmul.f32 %v720, %v744
        %753 = vst.msk [vmem:[%s291] sm:$0xff] %vm348, %v749
        %754 = vst.msk [vmem:[%s291 + $0x8] sm:$0xff] %vm348, %v750
        %755 = vst.msk [vmem:[%s291 + $0x10] sm:$0xff] %vm348, %v751
        %756 = vst.msk [vmem:[%s291 + $0x18] sm:$0xff] %vm348, %v752
        %s757 = sand.u32 %s151, 1
        %s758 = scalar_lea.sflag [#allocation3], %s757
        %s759 = sand.u32 %s151, 1
        %s760 = smul.addr %s759, 32
        %s761 = scalar_lea.vmem [#allocation2], %s760
        %s762 = sand.u32 %s179, 1
        %s763 = scalar_lea.sflag [#allocation5], %s762
        %s764 = sand.u32 %s179, 1
        %s765 = smul.addr %s764, 32
        %s766 = scalar_lea.vmem [#allocation4], %s765
        // Predicated region
        $region37: #{tpu_custom_call.1} parent=35 // pred_check
          %p767 = pneg %p161
        $region38: #{tpu_custom_call.1} parent=35 // pred_check_branch
          %769 = sbr.rel (%p767) target = $region40
        $region39: #{tpu_custom_call.1} parent=35 // pred_region
          %s770 = smul.u32 4, %s27
          %s772 = ssub.s32 512, 512
          %773 = vsyncadd %s758, %s772
          %s774 = sadd.s32 %s28, %s770
          %s775 = smul.addr %s774, 128
          %s776 = scalar_lea.hbm %s4, %s775
          %s777 = sshll.u32 %s761, 4
          %s778 = int_to_ptr.vmem [resolvable:$true] %s777
          %783 = dma.vmem_to_hbm [thread:$0]  %s778, 512, %s776, %s758, 128, 128, 8
        $region40: #{tpu_custom_call.1} parent=35 // pred_fallthru
          _
        // Predicated region
        $region41: #{tpu_custom_call.1} parent=35 // pred_check
          %p784 = pneg %p189
        $region42: #{tpu_custom_call.1} parent=35 // pred_check_branch
          %786 = sbr.rel (%p784) target = $region44
        $region43: #{tpu_custom_call.1} parent=35 // pred_region
          %s787 = smul.u32 4, %s27
          %s789 = ssub.s32 512, 512
          %790 = vsyncadd %s763, %s789
          %s791 = sadd.s32 %s28, %s787
          %s792 = smul.addr %s791, 128
          %s793 = scalar_lea.hbm %s5, %s792
          %s794 = sshll.u32 %s766, 4
          %s795 = int_to_ptr.vmem [resolvable:$true] %s794
          %800 = dma.vmem_to_hbm [thread:$0]  %s795, 512, %s793, %s763, 128, 128, 8
        $region44: #{tpu_custom_call.1} parent=35 // pred_fallthru
          _
      $region36: #{tpu_custom_call.1} parent=5 // pred_fallthru
        _
      %p801 = scmp.le.s32.totalorder 2, %s18
      // Predicated region
      $region45: #{tpu_custom_call.1} parent=5 // pred_check
        %p802 = pneg %p801
      $region46: #{tpu_custom_call.1} parent=5 // pred_check_branch
        %804 = sbr.rel (%p802) target = $region48
      $region47: #{tpu_custom_call.1} parent=5 // pred_region
        %s805 = ssub.s32 %s18, 2
        // Predicated region
        $region49: #{tpu_custom_call.1} parent=47 // pred_check
          %p806 = pneg %p167
        $region50: #{tpu_custom_call.1} parent=47 // pred_check_branch
          %808 = sbr.rel (%p806) target = $region52
        $region51: #{tpu_custom_call.1} parent=47 // pred_region
          %s809 = sand.u32 %s152, 1
          %s810 = scalar_lea.sflag [#allocation3], %s809
          %s811 = sand.u32 %s152, 1
          %s812 = smul.addr %s811, 32
          %s813 = scalar_lea.vmem [#allocation2], %s812
          %814 = dma.done %s810, 512
        $region52: #{tpu_custom_call.1} parent=47 // pred_fallthru
          _
        // Predicated region
        $region53: #{tpu_custom_call.1} parent=47 // pred_check
          %p815 = pneg %p195
        $region54: #{tpu_custom_call.1} parent=47 // pred_check_branch
          %817 = sbr.rel (%p815) target = $region56
        $region55: #{tpu_custom_call.1} parent=47 // pred_region
          %s818 = sand.u32 %s180, 1
          %s819 = scalar_lea.sflag [#allocation5], %s818
          %s820 = sand.u32 %s180, 1
          %s821 = smul.addr %s820, 32
          %s822 = scalar_lea.vmem [#allocation4], %s821
          %823 = dma.done %s819, 512
        $region56: #{tpu_custom_call.1} parent=47 // pred_fallthru
          _
      $region48: #{tpu_custom_call.1} parent=5 // pred_fallthru
        _
    $region6: #{tpu_custom_call.1} parent=1 // loop_footer
      %s22 = sadd.s32 1, %s18
    $region7: #{tpu_custom_call.1} parent=1 // loop_footer_branch
      %17 = sbr.rel target = $region3
    $region8: #{tpu_custom_call.1} parent=1 // loop_exit
      _
    %824 = vsyncpa [#allocation3], 1
    %s825 = scalar_lea.sflag [#allocation3], 1
    %826 = vsyncpa %s825, 1
    %827 = vsyncpa [#allocation5], 1
    %s828 = scalar_lea.sflag [#allocation5], 1
    %829 = vsyncpa %s828, 1

</llo_original>
